<compile_context>
chip_gen: v5e
topology: v5e:2x2
jax: 0.10.0
libtpu: 0.0.40
codegen_flags: <defaults>
</compile_context>

<pallas_src>
import functools

import jax
import jax.numpy as jnp
from jax.experimental import pallas as pl
from jax.experimental.pallas import tpu as pltpu

LANE = 128
SUBLANE = 8


def _round_up(n, m):
    return ((n + m - 1) // m) * m


def _pad_to(a, shape):
    return jnp.pad(a, [(0, t - s) for s, t in zip(a.shape, shape)])


def encoder_kernel(x_ref, w1_ref, b1_ref, w2_ref, b2_ref, w34_ref, b34_ref,
                   head_ref):
    x = x_ref[...]

    # fc1 + ReLU
    h1 = jnp.dot(x, w1_ref[...], preferred_element_type=jnp.float32) + b1_ref[...]
    h1 = jnp.maximum(h1, 0.0)

    # fc2 + ReLU
    h2 = jnp.dot(h1, w2_ref[...], preferred_element_type=jnp.float32) + b2_ref[...]
    h2 = jnp.maximum(h2, 0.0)

    # fused fc3|fc4 head (lane-dense, padded to a multiple of 128 output cols)
    head = jnp.dot(h2, w34_ref[...], preferred_element_type=jnp.float32) + b34_ref[...]
    head_ref[...] = head.astype(head_ref.dtype)


@functools.partial(jax.jit, static_argnames=("block_b",))
def encoder_forward(x, params, *, block_b=1024):
    """x: [B, ob_dim] float32. params: PyTorch-convention ([out, in]) weights."""
    B, ob_dim = x.shape
    embed_dim = params["w1"].shape[0]
    z_len = params["w3"].shape[0]

    # ---- Lane-dense operand padding (exact for Linear + ReLU). ----
    ob_pad = _round_up(ob_dim, LANE)
    emb_pad = _round_up(embed_dim, LANE)
    head_n = _round_up(max(2 * z_len, LANE), LANE)

    w1t = _pad_to(params["w1"].T, (ob_pad, emb_pad))
    b1 = _pad_to(params["b1"][None, :], (1, emb_pad))
    w2t = _pad_to(params["w2"].T, (emb_pad, emb_pad))
    b2 = _pad_to(params["b2"][None, :], (1, emb_pad))
    w34t = _pad_to(jnp.concatenate([params["w3"].T, params["w4"].T], axis=1),
                   (emb_pad, head_n))
    b34 = _pad_to(jnp.concatenate([params["b3"], params["b4"]], axis=0)[None, :],
                  (1, head_n))

    # ---- Batch tiling: minimize padding, amortize per-step overhead. ----
    steps = pl.cdiv(B, block_b)
    if B > 512 and steps < 2:
        steps = 2  # v7x: give both TensorCores work; ~free on v5e/v6e.
    tb = _round_up(pl.cdiv(B, steps), SUBLANE)
    b_pad = tb * steps
    xp = _pad_to(x, (b_pad, ob_pad))

    # Weights/biases stay resident across grid iterations (constant index_map).
    resident = lambda a: pl.BlockSpec(a.shape, lambda i: (0,) * a.ndim)

    head = pl.pallas_call(
        encoder_kernel,
        out_shape=jax.ShapeDtypeStruct((b_pad, head_n), jnp.float32),
        grid=(steps,),
        in_specs=[
            pl.BlockSpec((tb, ob_pad), lambda i: (i, 0)),  # streamed activations
            resident(w1t), resident(b1),
            resident(w2t), resident(b2),
            resident(w34t), resident(b34),
        ],
        out_specs=pl.BlockSpec((tb, head_n), lambda i: (i, 0)),
        compiler_params=pltpu.CompilerParams(dimension_semantics=("parallel",)),
    )(xp, w1t, b1, w2t, b2, w34t, b34)

    # Single slice of the useful columns, split inside jit next to the kernel.
    hz = head[:B, :2 * z_len]
    return hz[:, :z_len], hz[:, z_len:]


def make_params(key, ob_dim, embed_dim, z_len):
    """Deterministic synthetic params in PyTorch nn.Linear convention ([out, in])."""
    ks = jax.random.split(key, 8)
    scale = 0.1
    return {
        "w1": scale * jax.random.normal(ks[0], (embed_dim, ob_dim), jnp.float32),
        "b1": scale * jax.random.normal(ks[1], (embed_dim,), jnp.float32),
        "w2": scale * jax.random.normal(ks[2], (embed_dim, embed_dim), jnp.float32),
        "b2": scale * jax.random.normal(ks[3], (embed_dim,), jnp.float32),
        "w3": scale * jax.random.normal(ks[4], (z_len, embed_dim), jnp.float32),
        "b3": scale * jax.random.normal(ks[5], (z_len,), jnp.float32),
        "w4": scale * jax.random.normal(ks[6], (z_len, embed_dim), jnp.float32),
        "b4": scale * jax.random.normal(ks[7], (z_len,), jnp.float32),
    }


def reference_forward(x, p):
    """Pure-JAX reference matching PyTorch semantics (main_activation_func='relu')."""
    h1 = jnp.maximum(x @ p["w1"].T + p["b1"], 0.0)
    h2 = jnp.maximum(h1 @ p["w2"].T + p["b2"], 0.0)
    return h2 @ p["w3"].T + p["b3"], h2 @ p["w4"].T + p["b4"]


if __name__ == "__main__":
    # Small shapes consistent with the module: ob_space.shape[0]=16, embed_dim=32, z_len=8
    B, OB_DIM, EMBED_DIM, Z_LEN = 8, 16, 32, 8

    key = jax.random.PRNGKey(0)
    kx, kp = jax.random.split(key)
    x = jax.random.normal(kx, (B, OB_DIM), jnp.float32)
    params = make_params(kp, OB_DIM, EMBED_DIM, Z_LEN)

    mean, logvar = encoder_forward(x, params)
    mean, logvar = jax.block_until_ready((mean, logvar))

    ref_mean, ref_logvar = reference_forward(x, params)
    assert jnp.allclose(mean, ref_mean, atol=1e-5, rtol=1e-5)
    assert jnp.allclose(logvar, ref_logvar, atol=1e-5, rtol=1e-5)

    print("KERNEL_OK")
</pallas_src>

<mosaic_0001>
module attributes {stable_mosaic.version = 11 : i64} {
  func.func @encoder_kernel(%arg0: i32, %arg1: memref<8x128xf32, #tpu.memory_space<vmem>>, %arg2: memref<128x128xf32, #tpu.memory_space<vmem>>, %arg3: memref<1x128xf32, #tpu.memory_space<vmem>>, %arg4: memref<128x128xf32, #tpu.memory_space<vmem>>, %arg5: memref<1x128xf32, #tpu.memory_space<vmem>>, %arg6: memref<128x128xf32, #tpu.memory_space<vmem>>, %arg7: memref<1x128xf32, #tpu.memory_space<vmem>>, %arg8: memref<8x128xf32, #tpu.memory_space<vmem>>) attributes {dimension_semantics = [#tpu.dimension_semantics<parallel>], iteration_bounds = array<i64: 1>, scalar_prefetch = 0 : i64, scratch_operands = 0 : i64, tpu.core_type = #tpu.core_type<tc>, window_params = [{transform_indices = @transform_0, window_bounds = array<i64: 8, 128>}, {pipeline_mode = #tpu.pipeline_mode<synchronous>, transform_indices = @transform_1, window_bounds = array<i64: 128, 128>}, {pipeline_mode = #tpu.pipeline_mode<synchronous>, transform_indices = @transform_2, window_bounds = array<i64: 1, 128>}, {pipeline_mode = #tpu.pipeline_mode<synchronous>, transform_indices = @transform_3, window_bounds = array<i64: 128, 128>}, {pipeline_mode = #tpu.pipeline_mode<synchronous>, transform_indices = @transform_4, window_bounds = array<i64: 1, 128>}, {pipeline_mode = #tpu.pipeline_mode<synchronous>, transform_indices = @transform_5, window_bounds = array<i64: 128, 128>}, {pipeline_mode = #tpu.pipeline_mode<synchronous>, transform_indices = @transform_6, window_bounds = array<i64: 1, 128>}, {transform_indices = @transform_7, window_bounds = array<i64: 8, 128>}]} {
    %c0 = arith.constant 0 : index
    %c0_0 = arith.constant 0 : index
    %0 = vector.load %arg1[%c0, %c0_0] : memref<8x128xf32, #tpu.memory_space<vmem>>, vector<8x128xf32>
    %c0_1 = arith.constant 0 : index
    %c0_2 = arith.constant 0 : index
    %1 = vector.load %arg2[%c0_1, %c0_2] : memref<128x128xf32, #tpu.memory_space<vmem>>, vector<128x128xf32>
    %cst = arith.constant dense<0.000000e+00> : vector<8x128xf32>
    %2 = tpu.matmul %0, %1, %cst {dimension_numbers = #tpu.dot_dimension_numbers<[1], [0], [0], [1], [0, 0, 1, 1], [], []>} : vector<8x128xf32>, vector<128x128xf32>, vector<8x128xf32> -> vector<8x128xf32>
    %c0_3 = arith.constant 0 : index
    %c0_4 = arith.constant 0 : index
    %3 = vector.load %arg3[%c0_3, %c0_4] : memref<1x128xf32, #tpu.memory_space<vmem>>, vector<1x128xf32>
    %4 = vector.broadcast %3 : vector<1x128xf32> to vector<8x128xf32>
    %5 = arith.addf %2, %4 : vector<8x128xf32>
    %cst_5 = arith.constant 0.000000e+00 : f32
    %6 = vector.broadcast %cst_5 : f32 to vector<8x128xf32>
    %7 = arith.maximumf %5, %6 : vector<8x128xf32>
    %c0_6 = arith.constant 0 : index
    %c0_7 = arith.constant 0 : index
    %8 = vector.load %arg4[%c0_6, %c0_7] : memref<128x128xf32, #tpu.memory_space<vmem>>, vector<128x128xf32>
    %cst_8 = arith.constant dense<0.000000e+00> : vector<8x128xf32>
    %9 = tpu.matmul %7, %8, %cst_8 {dimension_numbers = #tpu.dot_dimension_numbers<[1], [0], [0], [1], [0, 0, 1, 1], [], []>} : vector<8x128xf32>, vector<128x128xf32>, vector<8x128xf32> -> vector<8x128xf32>
    %c0_9 = arith.constant 0 : index
    %c0_10 = arith.constant 0 : index
    %10 = vector.load %arg5[%c0_9, %c0_10] : memref<1x128xf32, #tpu.memory_space<vmem>>, vector<1x128xf32>
    %11 = vector.broadcast %10 : vector<1x128xf32> to vector<8x128xf32>
    %12 = arith.addf %9, %11 : vector<8x128xf32>
    %cst_11 = arith.constant 0.000000e+00 : f32
    %13 = vector.broadcast %cst_11 : f32 to vector<8x128xf32>
    %14 = arith.maximumf %12, %13 : vector<8x128xf32>
    %c0_12 = arith.constant 0 : index
    %c0_13 = arith.constant 0 : index
    %15 = vector.load %arg6[%c0_12, %c0_13] : memref<128x128xf32, #tpu.memory_space<vmem>>, vector<128x128xf32>
    %cst_14 = arith.constant dense<0.000000e+00> : vector<8x128xf32>
    %16 = tpu.matmul %14, %15, %cst_14 {dimension_numbers = #tpu.dot_dimension_numbers<[1], [0], [0], [1], [0, 0, 1, 1], [], []>} : vector<8x128xf32>, vector<128x128xf32>, vector<8x128xf32> -> vector<8x128xf32>
    %c0_15 = arith.constant 0 : index
    %c0_16 = arith.constant 0 : index
    %17 = vector.load %arg7[%c0_15, %c0_16] : memref<1x128xf32, #tpu.memory_space<vmem>>, vector<1x128xf32>
    %18 = vector.broadcast %17 : vector<1x128xf32> to vector<8x128xf32>
    %19 = arith.addf %16, %18 : vector<8x128xf32>
    %c0_17 = arith.constant 0 : index
    %c0_18 = arith.constant 0 : index
    %20 = vector.load %arg8[%c0_17, %c0_18] : memref<8x128xf32, #tpu.memory_space<vmem>>, vector<8x128xf32>
    tpu.vector_store %arg8[%c0_17, %c0_18], %19 {strides = array<i32>} : memref<8x128xf32, #tpu.memory_space<vmem>>, vector<8x128xf32>,
    return
  }
  func.func @transform_0(%arg0: i32) -> (i32, i32) {
    %c0_i32 = arith.constant 0 : i32
    %c0_i32_0 = arith.constant 0 : i32
    return %arg0, %c0_i32 : i32, i32
  }
  func.func @transform_1(%arg0: i32) -> (i32, i32) {
    %c0_i32 = arith.constant 0 : i32
    %c0_i32_0 = arith.constant 0 : i32
    %c0_i32_1 = arith.constant 0 : i32
    return %c0_i32, %c0_i32_0 : i32, i32
  }
  func.func @transform_2(%arg0: i32) -> (i32, i32) {
    %c0_i32 = arith.constant 0 : i32
    %c0_i32_0 = arith.constant 0 : i32
    %c0_i32_1 = arith.constant 0 : i32
    return %c0_i32, %c0_i32_0 : i32, i32
  }
  func.func @transform_3(%arg0: i32) -> (i32, i32) {
    %c0_i32 = arith.constant 0 : i32
    %c0_i32_0 = arith.constant 0 : i32
    %c0_i32_1 = arith.constant 0 : i32
    return %c0_i32, %c0_i32_0 : i32, i32
  }
  func.func @transform_4(%arg0: i32) -> (i32, i32) {
    %c0_i32 = arith.constant 0 : i32
    %c0_i32_0 = arith.constant 0 : i32
    %c0_i32_1 = arith.constant 0 : i32
    return %c0_i32, %c0_i32_0 : i32, i32
  }
  func.func @transform_5(%arg0: i32) -> (i32, i32) {
    %c0_i32 = arith.constant 0 : i32
    %c0_i32_0 = arith.constant 0 : i32
    %c0_i32_1 = arith.constant 0 : i32
    return %c0_i32, %c0_i32_0 : i32, i32
  }
  func.func @transform_6(%arg0: i32) -> (i32, i32) {
    %c0_i32 = arith.constant 0 : i32
    %c0_i32_0 = arith.constant 0 : i32
    %c0_i32_1 = arith.constant 0 : i32
    return %c0_i32, %c0_i32_0 : i32, i32
  }
  func.func @transform_7(%arg0: i32) -> (i32, i32) {
    %c0_i32 = arith.constant 0 : i32
    %c0_i32_0 = arith.constant 0 : i32
    return %arg0, %c0_i32 : i32, i32
  }
}

</mosaic_0001>

<llo_original>
// kernel: encoder_forward.1
$region0: #{encoder_forward.1}
  #allocation0 [shape = 'u32[]', space=smem, size = 0x4, offset = 0x4, fixed_abs, tag = 'smem constant byte address 0x4 - core index']
  #allocation1 [shape = 'u32[72,128]{1,0:T(1,128)}', space=vmem, size = 0x9000, scoped, tag = 'internal scratch']
  %s0 = inlined_call_operand.vmem [shape: f32[8,128], index: 0, kind: input, shape index: {}]
  %s1 = inlined_call_operand.vmem [shape: f32[128,128], index: 1, kind: input, shape index: {}]
  %s2 = inlined_call_operand.vmem [shape: f32[1,128], index: 2, kind: input, shape index: {}]
  %s3 = inlined_call_operand.vmem [shape: f32[128,128], index: 3, kind: input, shape index: {}]
  %s4 = inlined_call_operand.vmem [shape: f32[1,128], index: 4, kind: input, shape index: {}]
  %s5 = inlined_call_operand.vmem [shape: f32[128,128], index: 5, kind: input, shape index: {}]
  %s6 = inlined_call_operand.vmem [shape: f32[1,128], index: 6, kind: input, shape index: {}]
  %s7 = inlined_call_operand.vmem [shape: f32[8,128], index: 7, kind: output, shape index: {}]
  %s8 = sld [smem:[#allocation0]]
  $region38: #{encoder_forward.1} parent=0
    _
  %s10 = ssub.s32 1, %s8
  %s11 = scalar_select 0, %s10, %s8
  // Predicated region
  $region2: #{encoder_forward.1} parent=0 // pred_check
    _
  $region3: #{encoder_forward.1} parent=0 // pred_check_branch
    %13 = sbr.rel (0) target = $region5
  $region4: #{encoder_forward.1} parent=0 // pred_region
    _
  $region5: #{encoder_forward.1} parent=0 // pred_fallthru
    _
  // Predicated region
  $region6: #{encoder_forward.1} parent=0 // pred_check
    _
  $region7: #{encoder_forward.1} parent=0 // pred_check_branch
    %15 = sbr.rel (0) target = $region9
  $region8: #{encoder_forward.1} parent=0 // pred_region
    _
  $region9: #{encoder_forward.1} parent=0 // pred_fallthru
    _
  // Predicated region
  $region10: #{encoder_forward.1} parent=0 // pred_check
    _
  $region11: #{encoder_forward.1} parent=0 // pred_check_branch
    %17 = sbr.rel (0) target = $region13
  $region12: #{encoder_forward.1} parent=0 // pred_region
    _
  $region13: #{encoder_forward.1} parent=0 // pred_fallthru
    _
  // Predicated region
  $region14: #{encoder_forward.1} parent=0 // pred_check
    _
  $region15: #{encoder_forward.1} parent=0 // pred_check_branch
    %19 = sbr.rel (0) target = $region17
  $region16: #{encoder_forward.1} parent=0 // pred_region
    _
  $region17: #{encoder_forward.1} parent=0 // pred_fallthru
    _
  // Predicated region
  $region18: #{encoder_forward.1} parent=0 // pred_check
    _
  $region19: #{encoder_forward.1} parent=0 // pred_check_branch
    %21 = sbr.rel (0) target = $region21
  $region20: #{encoder_forward.1} parent=0 // pred_region
    _
  $region21: #{encoder_forward.1} parent=0 // pred_fallthru
    _
  // Predicated region
  $region22: #{encoder_forward.1} parent=0 // pred_check
    _
  $region23: #{encoder_forward.1} parent=0 // pred_check_branch
    %23 = sbr.rel (0) target = $region25
  $region24: #{encoder_forward.1} parent=0 // pred_region
    _
  $region25: #{encoder_forward.1} parent=0 // pred_fallthru
    _
  // Predicated region
  $region26: #{encoder_forward.1} parent=0 // pred_check
    _
  $region27: #{encoder_forward.1} parent=0 // pred_check_branch
    %25 = sbr.rel (0) target = $region29
  $region28: #{encoder_forward.1} parent=0 // pred_region
    _
  $region29: #{encoder_forward.1} parent=0 // pred_fallthru
    _
  %v26 = vld [vmem:[%s0] sm:$0xff]
  %v27 = vld [vmem:[%s1] sm:$0xff]
  %v28 = vld [vmem:[%s1 + $0x8] sm:$0xff]
  %v29 = vld [vmem:[%s1 + $0x10] sm:$0xff]
  %v30 = vld [vmem:[%s1 + $0x18] sm:$0xff]
  %v31 = vld [vmem:[%s1 + $0x20] sm:$0xff]
  %v32 = vld [vmem:[%s1 + $0x28] sm:$0xff]
  %v33 = vld [vmem:[%s1 + $0x30] sm:$0xff]
  %v34 = vld [vmem:[%s1 + $0x38] sm:$0xff]
  %v35 = vld [vmem:[%s1 + $0x40] sm:$0xff]
  %v36 = vld [vmem:[%s1 + $0x48] sm:$0xff]
  %v37 = vld [vmem:[%s1 + $0x50] sm:$0xff]
  %v38 = vld [vmem:[%s1 + $0x58] sm:$0xff]
  %v39 = vld [vmem:[%s1 + $0x60] sm:$0xff]
  %v40 = vld [vmem:[%s1 + $0x68] sm:$0xff]
  %v41 = vld [vmem:[%s1 + $0x70] sm:$0xff]
  %v42 = vld [vmem:[%s1 + $0x78] sm:$0xff]
  %v43 = vld [vmem:[%s2] sm:$0x1]
  %v45 = vperm.slane %v43, 0
  %47 = vmatpush.msra.mxu0 %v42
  %48 = vmatpush.msra.mxu0 %v41
  %49 = vmatpush.msra.mxu0 %v40
  %50 = vmatpush.msra.mxu0 %v39
  %51 = vmatpush.msra.mxu0 %v38
  %52 = vmatpush.msra.mxu0 %v37
  %53 = vmatpush.msra.mxu0 %v36
  %54 = vmatpush.msra.mxu0 %v35
  %55 = vmatpush.msra.mxu0 %v34
  %56 = vmatpush.msra.mxu0 %v33
  %57 = vmatpush.msra.mxu0 %v32
  %58 = vmatpush.msra.mxu0 %v31
  %59 = vmatpush.msra.mxu0 %v30
  %60 = vmatpush.msra.mxu0 %v29
  %61 = vmatpush.msra.mxu0 %v28
  %62 = vmatpush.msra.mxu0 %v27
  %63 = vmatmul.f32.gmra.mxu0 %v26
  %v64 = vpop.f32.mrf.mxu0
  %v65 = vadd.f32 %v45, %v64
  %66 = vdwg.mxu0
  %v67 = vmax.f32 %v65, 0.0
  %v68 = vld [vmem:[%s3] sm:$0xff]
  %v69 = vld [vmem:[%s3 + $0x8] sm:$0xff]
  %v70 = vld [vmem:[%s3 + $0x10] sm:$0xff]
  %v71 = vld [vmem:[%s3 + $0x18] sm:$0xff]
  %v72 = vld [vmem:[%s3 + $0x20] sm:$0xff]
  %v73 = vld [vmem:[%s3 + $0x28] sm:$0xff]
  %v74 = vld [vmem:[%s3 + $0x30] sm:$0xff]
  %v75 = vld [vmem:[%s3 + $0x38] sm:$0xff]
  %v76 = vld [vmem:[%s3 + $0x40] sm:$0xff]
  %v77 = vld [vmem:[%s3 + $0x48] sm:$0xff]
  %v78 = vld [vmem:[%s3 + $0x50] sm:$0xff]
  %v79 = vld [vmem:[%s3 + $0x58] sm:$0xff]
  %v80 = vld [vmem:[%s3 + $0x60] sm:$0xff]
  %v81 = vld [vmem:[%s3 + $0x68] sm:$0xff]
  %v82 = vld [vmem:[%s3 + $0x70] sm:$0xff]
  %v83 = vld [vmem:[%s3 + $0x78] sm:$0xff]
  %v84 = vld [vmem:[%s4] sm:$0x1]
  %v86 = vperm.slane %v84, 0
  %88 = vmatpush.msra.mxu0 %v83
  %89 = vmatpush.msra.mxu0 %v82
  %90 = vmatpush.msra.mxu0 %v81
  %91 = vmatpush.msra.mxu0 %v80
  %92 = vmatpush.msra.mxu0 %v79
  %93 = vmatpush.msra.mxu0 %v78
  %94 = vmatpush.msra.mxu0 %v77
  %95 = vmatpush.msra.mxu0 %v76
  %96 = vmatpush.msra.mxu0 %v75
  %97 = vmatpush.msra.mxu0 %v74
  %98 = vmatpush.msra.mxu0 %v73
  %99 = vmatpush.msra.mxu0 %v72
  %100 = vmatpush.msra.mxu0 %v71
  %101 = vmatpush.msra.mxu0 %v70
  %102 = vmatpush.msra.mxu0 %v69
  %103 = vmatpush.msra.mxu0 %v68
  %104 = vmatmul.f32.gmra.mxu0 %v67
  %v105 = vpop.f32.mrf.mxu0
  %v106 = vadd.f32 %v86, %v105
  %107 = vdwg.mxu0
  %v108 = vmax.f32 %v106, 0.0
  %v109 = vld [vmem:[%s5] sm:$0xff]
  %v110 = vld [vmem:[%s5 + $0x8] sm:$0xff]
  %v111 = vld [vmem:[%s5 + $0x10] sm:$0xff]
  %v112 = vld [vmem:[%s5 + $0x18] sm:$0xff]
  %v113 = vld [vmem:[%s5 + $0x20] sm:$0xff]
  %v114 = vld [vmem:[%s5 + $0x28] sm:$0xff]
  %v115 = vld [vmem:[%s5 + $0x30] sm:$0xff]
  %v116 = vld [vmem:[%s5 + $0x38] sm:$0xff]
  %v117 = vld [vmem:[%s5 + $0x40] sm:$0xff]
  %v118 = vld [vmem:[%s5 + $0x48] sm:$0xff]
  %v119 = vld [vmem:[%s5 + $0x50] sm:$0xff]
  %v120 = vld [vmem:[%s5 + $0x58] sm:$0xff]
  %v121 = vld [vmem:[%s5 + $0x60] sm:$0xff]
  %v122 = vld [vmem:[%s5 + $0x68] sm:$0xff]
  %v123 = vld [vmem:[%s5 + $0x70] sm:$0xff]
  %v124 = vld [vmem:[%s5 + $0x78] sm:$0xff]
  %v125 = vld [vmem:[%s6] sm:$0x1]
  %v127 = vperm.slane %v125, 0
  %129 = vmatpush.msra.mxu0 %v124
  %130 = vmatpush.msra.mxu0 %v123
  %131 = vmatpush.msra.mxu0 %v122
  %132 = vmatpush.msra.mxu0 %v121
  %133 = vmatpush.msra.mxu0 %v120
  %134 = vmatpush.msra.mxu0 %v119
  %135 = vmatpush.msra.mxu0 %v118
  %136 = vmatpush.msra.mxu0 %v117
  %137 = vmatpush.msra.mxu0 %v116
  %138 = vmatpush.msra.mxu0 %v115
  %139 = vmatpush.msra.mxu0 %v114
  %140 = vmatpush.msra.mxu0 %v113
  %141 = vmatpush.msra.mxu0 %v112
  %142 = vmatpush.msra.mxu0 %v111
  %143 = vmatpush.msra.mxu0 %v110
  %144 = vmatpush.msra.mxu0 %v109
  %145 = vmatmul.f32.gmra.mxu0 %v108
  %v146 = vpop.f32.mrf.mxu0
  %v147 = vadd.f32 %v127, %v146
  %148 = vdwg.mxu0
  %149 = vst [vmem:[%s7] sm:$0xff] %v147
  // Predicated region
  $region30: #{encoder_forward.1} parent=0 // pred_check
    _
  $region31: #{encoder_forward.1} parent=0 // pred_check_branch
    %151 = sbr.rel (0) target = $region33
  $region32: #{encoder_forward.1} parent=0 // pred_region
    _
  $region33: #{encoder_forward.1} parent=0 // pred_fallthru
    _
  // Predicated region
  $region34: #{encoder_forward.1} parent=0 // pred_check
    _
  $region35: #{encoder_forward.1} parent=0 // pred_check_branch
    %153 = sbr.rel (0) target = $region37
  $region36: #{encoder_forward.1} parent=0 // pred_region
    _
  $region37: #{encoder_forward.1} parent=0 // pred_fallthru
    _

</llo_original>
